<compile_context>
chip_gen: v5e
topology: v5e:2x2
jax: 0.10.0
libtpu: 0.0.40
codegen_flags: <defaults>
</compile_context>

<pallas_src>
import functools

import jax
import jax.numpy as jnp
from jax.experimental import pallas as pl
from jax.experimental.pallas import tpu as pltpu

_LANE = 128


def _fold_lanes(x):
    """(N, T) -> (N, 128) by summing 128-lane chunks (pure VPU adds, no XLU)."""
    _, t = x.shape
    acc = x[:, 0:_LANE]
    for j in range(1, t // _LANE):
        acc = acc + x[:, j * _LANE:(j + 1) * _LANE]
    return acc


def _tesloss2_kernel(yhat_ref, label_ref, mask_ref, tpr_ref, fpr_ref,
                     tp_num_ref, tp_den_ref, tot_num_ref, tot_den_ref,
                     *, num_samples, num_channels, inv_n):
    t = pl.program_id(0)

    @pl.when(t == 0)
    def _init():
        tp_num_ref[...] = jnp.zeros_like(tp_num_ref)
        tp_den_ref[...] = jnp.zeros_like(tp_den_ref)
        tot_num_ref[...] = jnp.zeros_like(tot_num_ref)
        tot_den_ref[...] = jnp.zeros_like(tot_den_ref)

    # ---- S(hw) for this HW tile = #samples whose argmin over channels is 0. ----
    # Channels are read as (1, T) row slices of per-sample ref views (.at[n] is a
    # zero-cost view), so at most two channel rows are live in vregs at any time
    # and no sublane relayout is required.
    s = None
    for n in range(num_samples):
        yn = yhat_ref.at[n]                       # Ref view (C, T), no load yet
        y0 = yn[0:1, :]                           # (1, T)
        if num_channels == 1:
            pre_pos_n = jnp.ones_like(y0)         # argmin over a single channel is 0
        else:
            best_rest = yn[1:2, :]
            for c in range(2, num_channels):      # static channel unroll
                best_rest = jnp.minimum(best_rest, yn[c:c + 1, :])
            # argmin == 0  <=>  channel-0 logit <= min of the rest (ties -> first).
            pre_pos_n = (y0 <= best_rest).astype(jnp.float32)
        s = pre_pos_n if s is None else s + pre_pos_n
    # s : (1, T)

    m = mask_ref[...]                             # (N, T) f32, batch on sublanes
    lab = label_ref[...]                          # (N, T) int
    lp = (lab == 0).astype(jnp.float32)           # P_label indicator

    mm = m * m                                    # mask appears twice in numerator
    smm = s * mm                                  # (N, T), broadcast over sublanes

    # Binary labels {0, 1} (as in the module's intended use): N_label = mask - P_label
    # pointwise, so the FPR branch is derived from totals in the finalize block
    # (saves one compare/cast and two multiplies per step).
    tp_num_ref[...] += _fold_lanes(smm * lp)
    tp_den_ref[...] += _fold_lanes(lp * m)
    tot_num_ref[...] += _fold_lanes(smm)
    tot_den_ref[...] += _fold_lanes(m)

    @pl.when(t == pl.num_programs(0) - 1)
    def _finalize():
        tp_num = jnp.sum(tp_num_ref[...], axis=1, keepdims=True)    # (N, 1)
        tp_den = jnp.sum(tp_den_ref[...], axis=1, keepdims=True)
        fp_num = jnp.sum(tot_num_ref[...], axis=1, keepdims=True) - tp_num
        fp_den = jnp.sum(tot_den_ref[...], axis=1, keepdims=True) - tp_den
        # NOTE: like the PyTorch reference, a sample with no masked positive
        # (or negative) pixels yields Inf/NaN here (faithful, not guarded).
        tpr_ref[...] = jnp.sum(tp_num / tp_den, axis=0, keepdims=True) * inv_n
        fpr_ref[...] = jnp.sum(fp_num / fp_den, axis=0, keepdims=True) * inv_n


def tesloss2(y_hat, label, mask):
    """y_hat: (N, C, H, W); label/mask: (N, 1, H, W). Returns (TPR, FPR) scalars."""
    N, C, H, W = y_hat.shape
    HW = H * W

    # Lane-dense layout: spatial flattened onto lanes, batch on sublanes.
    y_r = y_hat.reshape(N, C, HW)
    lab_r = label.reshape(N, HW)
    m_r = mask.reshape(N, HW).astype(jnp.float32)

    # HW tile size (lanes): >= 512 where possible (v5e roofline guidance).
    if HW >= 2048:
        tile_hw = 2048
    elif HW >= 512:
        tile_hw = 512
    else:
        tile_hw = 128
    hw_pad = ((HW + tile_hw - 1) // tile_hw) * tile_hw
    if hw_pad != HW:
        pad = hw_pad - HW
        # Zero mask in the padded lanes makes them inert in every accumulator.
        y_r = jnp.pad(y_r, ((0, 0), (0, 0), (0, pad)))
        lab_r = jnp.pad(lab_r, ((0, 0), (0, pad)), constant_values=1)
        m_r = jnp.pad(m_r, ((0, 0), (0, pad)))
    num_tiles = hw_pad // tile_hw

    kernel = functools.partial(
        _tesloss2_kernel, num_samples=N, num_channels=C, inv_n=1.0 / N)

    cost = pl.CostEstimate(
        flops=int(N * hw_pad * (C + 10)),
        transcendentals=0,
        bytes_accessed=int(4 * hw_pad * N * (C + 2) + 8),
    )

    tpr, fpr = pl.pallas_call(
        kernel,
        out_shape=(
            jax.ShapeDtypeStruct((1, 1), jnp.float32),
            jax.ShapeDtypeStruct((1, 1), jnp.float32),
        ),
        grid_spec=pltpu.PrefetchScalarGridSpec(
            num_scalar_prefetch=0,
            grid=(num_tiles,),
            in_specs=[
                # All inputs stream one HW tile per step (double-buffered by the
                # pipeline); nothing is held resident -> tiny VMEM on every gen.
                pl.BlockSpec((N, C, tile_hw), lambda t: (0, 0, t)),
                pl.BlockSpec((N, tile_hw), lambda t: (0, t)),
                pl.BlockSpec((N, tile_hw), lambda t: (0, t)),
            ],
            out_specs=(
                pl.BlockSpec((1, 1), lambda t: (0, 0)),
                pl.BlockSpec((1, 1), lambda t: (0, 0)),
            ),
            # Per-sample lane-width accumulators; XLU reductions, divides and the
            # batch mean happen exactly once, in the finalize pl.when.
            scratch_shapes=[pltpu.VMEM((N, 128), jnp.float32)] * 4,
        ),
        compiler_params=pltpu.CompilerParams(
            # The single grid axis is the HW reduction (accumulators) -> arbitrary.
            # TODO(synk): on v7x, shard this axis across the 2 TensorCores with
            # per-core partial outputs combined in the wrapper.
            dimension_semantics=("arbitrary",),
            vmem_limit_bytes=32 * 1024 * 1024,
        ),
        cost_estimate=cost,
    )(y_r, lab_r, m_r)

    return tpr[0, 0], fpr[0, 0]


def _reference(y_hat, label, mask):
    # Literal JAX translation of the PyTorch forward (identical broadcasting).
    premat = jnp.argmin(y_hat, axis=1)                     # (N, H, W)
    P_pre = jnp.where(premat == 0, 1, 0) * mask            # (N, N, H, W)
    P_label = jnp.where(label == 0, 1, 0) * mask           # (N, 1, H, W)
    N_label = jnp.where(label == 1, 1, 0) * mask
    TPR = jnp.sum(P_pre * P_label, axis=(1, 2, 3)) / jnp.sum(P_label, axis=(1, 2, 3))
    FPR = jnp.sum(P_pre * N_label, axis=(1, 2, 3)) / jnp.sum(N_label, axis=(1, 2, 3))
    return jnp.mean(TPR, axis=0), jnp.mean(FPR, axis=0)


if __name__ == "__main__":
    key = jax.random.PRNGKey(0)
    k1, k2, k3 = jax.random.split(key, 3)

    N, C, H, W = 2, 2, 16, 16
    y_hat = jax.random.normal(k1, (N, C, H, W), dtype=jnp.float32)
    # Binary labels: 0 = positive class, 1 = negative class.
    label = jax.random.bernoulli(k2, 0.5, (N, 1, H, W)).astype(jnp.int32)
    # Binary float mask with broad coverage so TPR/FPR denominators are nonzero.
    mask = (jax.random.uniform(k3, (N, 1, H, W)) > 0.3).astype(jnp.float32)

    tpr, fpr = tesloss2(y_hat, label, mask)
    tpr, fpr = jax.block_until_ready((tpr, fpr))

    tpr_ref, fpr_ref = _reference(y_hat, label, mask)
    assert jnp.allclose(tpr, tpr_ref, atol=1e-5, rtol=1e-5), (tpr, tpr_ref)
    assert jnp.allclose(fpr, fpr_ref, atol=1e-5, rtol=1e-5), (fpr, fpr_ref)

    print("KERNEL_OK")
</pallas_src>

<mosaic_0001>
module attributes {stable_mosaic.version = 11 : i64} {
  func.func @_tesloss2_kernel(%arg0: i32, %arg1: memref<2x2x128xf32, #tpu.memory_space<vmem>>, %arg2: memref<2x128xi32, #tpu.memory_space<vmem>>, %arg3: memref<2x128xf32, #tpu.memory_space<vmem>>, %arg4: memref<1x1xf32, #tpu.memory_space<vmem>>, %arg5: memref<1x1xf32, #tpu.memory_space<vmem>>, %arg6: memref<2x128xf32, #tpu.memory_space<vmem>>, %arg7: memref<2x128xf32, #tpu.memory_space<vmem>>, %arg8: memref<2x128xf32, #tpu.memory_space<vmem>>, %arg9: memref<2x128xf32, #tpu.memory_space<vmem>>) attributes {dimension_semantics = [#tpu.dimension_semantics<arbitrary>], iteration_bounds = array<i64: 2>, scalar_prefetch = 0 : i64, scratch_operands = 4 : i64, tpu.core_type = #tpu.core_type<tc>, window_params = [{transform_indices = @transform_0, window_bounds = array<i64: 2, 2, 128>}, {transform_indices = @transform_1, window_bounds = array<i64: 2, 128>}, {transform_indices = @transform_2, window_bounds = array<i64: 2, 128>}, {pipeline_mode = #tpu.pipeline_mode<synchronous>, transform_indices = @transform_3, window_bounds = array<i64: 1, 1>}, {pipeline_mode = #tpu.pipeline_mode<synchronous>, transform_indices = @transform_4, window_bounds = array<i64: 1, 1>}]} {
    %c0_i32 = arith.constant 0 : i32
    %0 = arith.cmpi eq, %arg0, %c0_i32 : i32
    %1 = arith.extui %0 : i1 to i32
    %c0_i32_0 = arith.constant 0 : i32
    %2 = arith.cmpi ne, %1, %c0_i32_0 : i32
    scf.if %2 {
      %cst = arith.constant 0.000000e+00 : f32
      %48 = vector.broadcast %cst : f32 to vector<2x128xf32>
      %c0_41 = arith.constant 0 : index
      %c0_42 = arith.constant 0 : index
      %49 = vector.load %arg6[%c0_41, %c0_42] : memref<2x128xf32, #tpu.memory_space<vmem>>, vector<2x128xf32>
      tpu.vector_store %arg6[%c0_41, %c0_42], %48 {strides = array<i32>} : memref<2x128xf32, #tpu.memory_space<vmem>>, vector<2x128xf32>,
      %cst_43 = arith.constant 0.000000e+00 : f32
      %50 = vector.broadcast %cst_43 : f32 to vector<2x128xf32>
      %c0_44 = arith.constant 0 : index
      %c0_45 = arith.constant 0 : index
      %51 = vector.load %arg7[%c0_44, %c0_45] : memref<2x128xf32, #tpu.memory_space<vmem>>, vector<2x128xf32>
      tpu.vector_store %arg7[%c0_44, %c0_45], %50 {strides = array<i32>} : memref<2x128xf32, #tpu.memory_space<vmem>>, vector<2x128xf32>,
      %cst_46 = arith.constant 0.000000e+00 : f32
      %52 = vector.broadcast %cst_46 : f32 to vector<2x128xf32>
      %c0_47 = arith.constant 0 : index
      %c0_48 = arith.constant 0 : index
      %53 = vector.load %arg8[%c0_47, %c0_48] : memref<2x128xf32, #tpu.memory_space<vmem>>, vector<2x128xf32>
      tpu.vector_store %arg8[%c0_47, %c0_48], %52 {strides = array<i32>} : memref<2x128xf32, #tpu.memory_space<vmem>>, vector<2x128xf32>,
      %cst_49 = arith.constant 0.000000e+00 : f32
      %54 = vector.broadcast %cst_49 : f32 to vector<2x128xf32>
      %c0_50 = arith.constant 0 : index
      %c0_51 = arith.constant 0 : index
      %55 = vector.load %arg9[%c0_50, %c0_51] : memref<2x128xf32, #tpu.memory_space<vmem>>, vector<2x128xf32>
      tpu.vector_store %arg9[%c0_50, %c0_51], %54 {strides = array<i32>} : memref<2x128xf32, #tpu.memory_space<vmem>>, vector<2x128xf32>,
    } else {
    }
    %c0_i32_1 = arith.constant 0 : i32
    %c0_i32_2 = arith.constant 0 : i32
    %c0_i32_3 = arith.constant 0 : i32
    %3 = tpu.memref_slice %arg1[%c0_i32_1, %c0_i32_2, %c0_i32_3] : memref<2x2x128xf32, #tpu.memory_space<vmem>> -> memref<1x2x128xf32, #tpu.memory_space<vmem>>
    %4 = tpu.memref_squeeze %3 : memref<1x2x128xf32, #tpu.memory_space<vmem>> -> memref<2x128xf32, #tpu.memory_space<vmem>>
    %c0 = arith.constant 0 : index
    %c0_4 = arith.constant 0 : index
    %5 = vector.load %4[%c0, %c0_4] : memref<2x128xf32, #tpu.memory_space<vmem>>, vector<1x128xf32>
    %c0_i32_5 = arith.constant 0 : i32
    %c0_i32_6 = arith.constant 0 : i32
    %c0_i32_7 = arith.constant 0 : i32
    %6 = tpu.memref_slice %arg1[%c0_i32_5, %c0_i32_6, %c0_i32_7] : memref<2x2x128xf32, #tpu.memory_space<vmem>> -> memref<1x2x128xf32, #tpu.memory_space<vmem>>
    %7 = tpu.memref_squeeze %6 : memref<1x2x128xf32, #tpu.memory_space<vmem>> -> memref<2x128xf32, #tpu.memory_space<vmem>>
    %c1 = arith.constant 1 : index
    %c0_8 = arith.constant 0 : index
    %8 = vector.load %7[%c1, %c0_8] : memref<2x128xf32, #tpu.memory_space<vmem>>, vector<1x128xf32>
    %9 = arith.cmpf ole, %5, %8 : vector<1x128xf32>
    %10 = arith.extui %9 : vector<1x128xi1> to vector<1x128xi32>
    %11 = arith.sitofp %10 : vector<1x128xi32> to vector<1x128xf32>
    %c1_i32 = arith.constant 1 : i32
    %c0_i32_9 = arith.constant 0 : i32
    %c0_i32_10 = arith.constant 0 : i32
    %12 = tpu.memref_slice %arg1[%c1_i32, %c0_i32_9, %c0_i32_10] : memref<2x2x128xf32, #tpu.memory_space<vmem>> -> memref<1x2x128xf32, #tpu.memory_space<vmem>>
    %13 = tpu.memref_squeeze %12 : memref<1x2x128xf32, #tpu.memory_space<vmem>> -> memref<2x128xf32, #tpu.memory_space<vmem>>
    %c0_11 = arith.constant 0 : index
    %c0_12 = arith.constant 0 : index
    %14 = vector.load %13[%c0_11, %c0_12] : memref<2x128xf32, #tpu.memory_space<vmem>>, vector<1x128xf32>
    %c1_i32_13 = arith.constant 1 : i32
    %c0_i32_14 = arith.constant 0 : i32
    %c0_i32_15 = arith.constant 0 : i32
    %15 = tpu.memref_slice %arg1[%c1_i32_13, %c0_i32_14, %c0_i32_15] : memref<2x2x128xf32, #tpu.memory_space<vmem>> -> memref<1x2x128xf32, #tpu.memory_space<vmem>>
    %16 = tpu.memref_squeeze %15 : memref<1x2x128xf32, #tpu.memory_space<vmem>> -> memref<2x128xf32, #tpu.memory_space<vmem>>
    %c1_16 = arith.constant 1 : index
    %c0_17 = arith.constant 0 : index
    %17 = vector.load %16[%c1_16, %c0_17] : memref<2x128xf32, #tpu.memory_space<vmem>>, vector<1x128xf32>
    %18 = arith.cmpf ole, %14, %17 : vector<1x128xf32>
    %19 = arith.extui %18 : vector<1x128xi1> to vector<1x128xi32>
    %20 = arith.sitofp %19 : vector<1x128xi32> to vector<1x128xf32>
    %21 = arith.addf %11, %20 : vector<1x128xf32>
    %c0_18 = arith.constant 0 : index
    %c0_19 = arith.constant 0 : index
    %22 = vector.load %arg3[%c0_18, %c0_19] : memref<2x128xf32, #tpu.memory_space<vmem>>, vector<2x128xf32>
    %c0_20 = arith.constant 0 : index
    %c0_21 = arith.constant 0 : index
    %23 = vector.load %arg2[%c0_20, %c0_21] : memref<2x128xi32, #tpu.memory_space<vmem>>, vector<2x128xi32>
    %c0_i32_22 = arith.constant 0 : i32
    %24 = vector.broadcast %c0_i32_22 : i32 to vector<2x128xi32>
    %25 = arith.cmpi eq, %23, %24 : vector<2x128xi32>
    %26 = arith.extui %25 : vector<2x128xi1> to vector<2x128xi32>
    %27 = arith.sitofp %26 : vector<2x128xi32> to vector<2x128xf32>
    %28 = arith.mulf %22, %22 : vector<2x128xf32>
    %29 = vector.broadcast %21 : vector<1x128xf32> to vector<2x128xf32>
    %30 = arith.mulf %29, %28 : vector<2x128xf32>
    %c0_23 = arith.constant 0 : index
    %c0_24 = arith.constant 0 : index
    %31 = vector.load %arg6[%c0_23, %c0_24] : memref<2x128xf32, #tpu.memory_space<vmem>>, vector<2x128xf32>
    %32 = arith.mulf %30, %27 : vector<2x128xf32>
    %33 = arith.addf %31, %32 : vector<2x128xf32>
    %c0_25 = arith.constant 0 : index
    %c0_26 = arith.constant 0 : index
    %34 = vector.load %arg6[%c0_25, %c0_26] : memref<2x128xf32, #tpu.memory_space<vmem>>, vector<2x128xf32>
    tpu.vector_store %arg6[%c0_25, %c0_26], %33 {strides = array<i32>} : memref<2x128xf32, #tpu.memory_space<vmem>>, vector<2x128xf32>,
    %c0_27 = arith.constant 0 : index
    %c0_28 = arith.constant 0 : index
    %35 = vector.load %arg7[%c0_27, %c0_28] : memref<2x128xf32, #tpu.memory_space<vmem>>, vector<2x128xf32>
    %36 = arith.mulf %27, %22 : vector<2x128xf32>
    %37 = arith.addf %35, %36 : vector<2x128xf32>
    %c0_29 = arith.constant 0 : index
    %c0_30 = arith.constant 0 : index
    %38 = vector.load %arg7[%c0_29, %c0_30] : memref<2x128xf32, #tpu.memory_space<vmem>>, vector<2x128xf32>
    tpu.vector_store %arg7[%c0_29, %c0_30], %37 {strides = array<i32>} : memref<2x128xf32, #tpu.memory_space<vmem>>, vector<2x128xf32>,
    %c0_31 = arith.constant 0 : index
    %c0_32 = arith.constant 0 : index
    %39 = vector.load %arg8[%c0_31, %c0_32] : memref<2x128xf32, #tpu.memory_space<vmem>>, vector<2x128xf32>
    %40 = arith.addf %39, %30 : vector<2x128xf32>
    %c0_33 = arith.constant 0 : index
    %c0_34 = arith.constant 0 : index
    %41 = vector.load %arg8[%c0_33, %c0_34] : memref<2x128xf32, #tpu.memory_space<vmem>>, vector<2x128xf32>
    tpu.vector_store %arg8[%c0_33, %c0_34], %40 {strides = array<i32>} : memref<2x128xf32, #tpu.memory_space<vmem>>, vector<2x128xf32>,
    %c0_35 = arith.constant 0 : index
    %c0_36 = arith.constant 0 : index
    %42 = vector.load %arg9[%c0_35, %c0_36] : memref<2x128xf32, #tpu.memory_space<vmem>>, vector<2x128xf32>
    %43 = arith.addf %42, %22 : vector<2x128xf32>
    %c0_37 = arith.constant 0 : index
    %c0_38 = arith.constant 0 : index
    %44 = vector.load %arg9[%c0_37, %c0_38] : memref<2x128xf32, #tpu.memory_space<vmem>>, vector<2x128xf32>
    tpu.vector_store %arg9[%c0_37, %c0_38], %43 {strides = array<i32>} : memref<2x128xf32, #tpu.memory_space<vmem>>, vector<2x128xf32>,
    %c1_i32_39 = arith.constant 1 : i32
    %45 = arith.cmpi eq, %arg0, %c1_i32_39 : i32
    %46 = arith.extui %45 : i1 to i32
    %c0_i32_40 = arith.constant 0 : i32
    %47 = arith.cmpi ne, %46, %c0_i32_40 : i32
    scf.if %47 {
      %c0_41 = arith.constant 0 : index
      %c0_42 = arith.constant 0 : index
      %48 = vector.load %arg6[%c0_41, %c0_42] : memref<2x128xf32, #tpu.memory_space<vmem>>, vector<2x128xf32>
      %cst = arith.constant dense<0.000000e+00> : vector<2xf32>
      %49 = vector.multi_reduction <add>, %48, %cst [1] : vector<2x128xf32> to vector<2xf32>
      %50 = vector.shape_cast %49 : vector<2xf32> to vector<2x1xf32>
      %c0_43 = arith.constant 0 : index
      %c0_44 = arith.constant 0 : index
      %51 = vector.load %arg7[%c0_43, %c0_44] : memref<2x128xf32, #tpu.memory_space<vmem>>, vector<2x128xf32>
      %cst_45 = arith.constant dense<0.000000e+00> : vector<2xf32>
      %52 = vector.multi_reduction <add>, %51, %cst_45 [1] : vector<2x128xf32> to vector<2xf32>
      %53 = vector.shape_cast %52 : vector<2xf32> to vector<2x1xf32>
      %c0_46 = arith.constant 0 : index
      %c0_47 = arith.constant 0 : index
      %54 = vector.load %arg8[%c0_46, %c0_47] : memref<2x128xf32, #tpu.memory_space<vmem>>, vector<2x128xf32>
      %cst_48 = arith.constant dense<0.000000e+00> : vector<2xf32>
      %55 = vector.multi_reduction <add>, %54, %cst_48 [1] : vector<2x128xf32> to vector<2xf32>
      %56 = vector.shape_cast %55 : vector<2xf32> to vector<2x1xf32>
      %57 = arith.subf %56, %50 : vector<2x1xf32>
      %c0_49 = arith.constant 0 : index
      %c0_50 = arith.constant 0 : index
      %58 = vector.load %arg9[%c0_49, %c0_50] : memref<2x128xf32, #tpu.memory_space<vmem>>, vector<2x128xf32>
      %cst_51 = arith.constant dense<0.000000e+00> : vector<2xf32>
      %59 = vector.multi_reduction <add>, %58, %cst_51 [1] : vector<2x128xf32> to vector<2xf32>
      %60 = vector.shape_cast %59 : vector<2xf32> to vector<2x1xf32>
      %61 = arith.subf %60, %53 : vector<2x1xf32>
      %62 = arith.divf %50, %53 : vector<2x1xf32>
      %cst_52 = arith.constant dense<0.000000e+00> : vector<1xf32>
      %63 = vector.multi_reduction <add>, %62, %cst_52 [0] : vector<2x1xf32> to vector<1xf32>
      %64 = vector.shape_cast %63 : vector<1xf32> to vector<1x1xf32>
      %cst_53 = arith.constant 5.000000e-01 : f32
      %65 = vector.broadcast %cst_53 : f32 to vector<1x1xf32>
      %66 = arith.mulf %64, %65 : vector<1x1xf32>
      %c0_54 = arith.constant 0 : index
      %c0_55 = arith.constant 0 : index
      %67 = vector.load %arg4[%c0_54, %c0_55] : memref<1x1xf32, #tpu.memory_space<vmem>>, vector<1x1xf32>
      tpu.vector_store %arg4[%c0_54, %c0_55], %66 {strides = array<i32>} : memref<1x1xf32, #tpu.memory_space<vmem>>, vector<1x1xf32>,
      %68 = arith.divf %57, %61 : vector<2x1xf32>
      %cst_56 = arith.constant dense<0.000000e+00> : vector<1xf32>
      %69 = vector.multi_reduction <add>, %68, %cst_56 [0] : vector<2x1xf32> to vector<1xf32>
      %70 = vector.shape_cast %69 : vector<1xf32> to vector<1x1xf32>
      %cst_57 = arith.constant 5.000000e-01 : f32
      %71 = vector.broadcast %cst_57 : f32 to vector<1x1xf32>
      %72 = arith.mulf %70, %71 : vector<1x1xf32>
      %c0_58 = arith.constant 0 : index
      %c0_59 = arith.constant 0 : index
      %73 = vector.load %arg5[%c0_58, %c0_59] : memref<1x1xf32, #tpu.memory_space<vmem>>, vector<1x1xf32>
      tpu.vector_store %arg5[%c0_58, %c0_59], %72 {strides = array<i32>} : memref<1x1xf32, #tpu.memory_space<vmem>>, vector<1x1xf32>,
    } else {
    }
    return
  }
  func.func @transform_0(%arg0: i32) -> (i32, i32, i32) {
    %c0_i32 = arith.constant 0 : i32
    %c0_i32_0 = arith.constant 0 : i32
    %c0_i32_1 = arith.constant 0 : i32
    return %c0_i32, %c0_i32_0, %arg0 : i32, i32, i32
  }
  func.func @transform_1(%arg0: i32) -> (i32, i32) {
    %c0_i32 = arith.constant 0 : i32
    %c0_i32_0 = arith.constant 0 : i32
    return %c0_i32, %arg0 : i32, i32
  }
  func.func @transform_2(%arg0: i32) -> (i32, i32) {
    %c0_i32 = arith.constant 0 : i32
    %c0_i32_0 = arith.constant 0 : i32
    return %c0_i32, %arg0 : i32, i32
  }
  func.func @transform_3(%arg0: i32) -> (i32, i32) {
    %c0_i32 = arith.constant 0 : i32
    %c0_i32_0 = arith.constant 0 : i32
    %c0_i32_1 = arith.constant 0 : i32
    return %c0_i32, %c0_i32_0 : i32, i32
  }
  func.func @transform_4(%arg0: i32) -> (i32, i32) {
    %c0_i32 = arith.constant 0 : i32
    %c0_i32_0 = arith.constant 0 : i32
    %c0_i32_1 = arith.constant 0 : i32
    return %c0_i32, %c0_i32_0 : i32, i32
  }
}

</mosaic_0001>

<llo_original>
// kernel: tpu_custom_call.1
$region0: #{tpu_custom_call.1}
  #allocation0 [shape = 'u32[]', space=smem, size = 0x4, offset = 0x4, fixed_abs, tag = 'smem constant byte address 0x4 - core index']
  #allocation1 [shape = 'u32[72,128]{1,0:T(1,128)}', space=vmem, size = 0x9000, scoped, tag = 'internal scratch']
  #allocation2 [shape = 'f32[2,128]{1,0:T(2,128)}', space=vmem, size = 0x400, scoped, tag = 'scratch operand']
  #allocation3 [shape = 'f32[2,128]{1,0:T(2,128)}', space=vmem, size = 0x400, scoped, tag = 'scratch operand']
  #allocation4 [shape = 'f32[2,128]{1,0:T(2,128)}', space=vmem, size = 0x400, scoped, tag = 'scratch operand']
  #allocation5 [shape = 'f32[2,128]{1,0:T(2,128)}', space=vmem, size = 0x400, scoped, tag = 'scratch operand']
  %s0 = inlined_call_operand.hbm [shape: f32[2,2,256], index: 0, kind: input, shape index: {}]
  %s1 = inlined_call_operand.hbm [shape: s32[2,256], index: 1, kind: input, shape index: {}]
  %s2 = inlined_call_operand.hbm [shape: f32[2,256], index: 2, kind: input, shape index: {}]
  %s3 = inlined_call_operand.hbm [shape: f32[1,1], index: 3, kind: output, shape index: {0}]
  %s4 = inlined_call_operand.hbm [shape: f32[1,1], index: 4, kind: output, shape index: {1}]
  %5 = xla_tuple %s3, %s4
  %s6 = sld [smem:[#allocation0]]
  $region73: #{tpu_custom_call.1} parent=0
    _
  %s8 = ssub.s32 1, %s6
  %s9 = scalar_select 0, %s8, %s6
  $region1: #{tpu_custom_call.1} parent=0
    #allocation6 [shape = 'u8[4096]{0}', space=vmem, size = 0x1000, scoped, tag = 'input window, operand 0']
    #allocation7 [shape = 's32[2]{0}', space=sflag, size = 0x8, scoped, tag = 'scoped memory for tpu_custom_call.1']
    #allocation8 [shape = 's32[2]{0}', space=sflag, size = 0x8, scoped, tag = 'scoped memory for tpu_custom_call.1']
    #allocation9 [shape = 'u8[2048]{0}', space=vmem, size = 0x800, scoped, tag = 'input window, operand 1']
    #allocation10 [shape = 's32[2]{0}', space=sflag, size = 0x8, scoped, tag = 'scoped memory for tpu_custom_call.1']
    #allocation11 [shape = 'u8[2048]{0}', space=vmem, size = 0x800, scoped, tag = 'input window, operand 2']
    #allocation12 [shape = 'u8[512]{0}', space=vmem, size = 0x400, scoped, tag = 'output window, operand 0, single buffered']
    #allocation13 [shape = 'u8[512]{0}', space=vmem, size = 0x400, scoped, tag = 'output window, operand 1, single buffered']
    #allocation14 [shape = 's32[1]{0}', space=sflag, size = 0x4, scoped, tag = 'scoped memory for tpu_custom_call.1']
    %10 = vsyncpa [#allocation7], 0
    %s11 = scalar_lea.sflag [#allocation7], 1
    %12 = vsyncpa %s11, 0
    %13 = vsyncpa [#allocation10], 0
    %s14 = scalar_lea.sflag [#allocation10], 1
    %15 = vsyncpa %s14, 0
    %16 = vsyncpa [#allocation8], 0
    %17 = vsyncpa [#allocation14], 0
    loop: start=0, step=1, limit=4
    $region2: #{tpu_custom_call.1} parent=1 // loop_pre_header
      _
    $region3: #{tpu_custom_call.1} parent=1 // loop_header
      %s19 = sphi 0, %s23
      %p20 = scmp.ge.s32.totalorder %s19, 4
      %s29 = sphi 0, %s31
      %s32 = sphi 0, %s29
      %s33 = sphi 0, %s32
      %s49 = sphi 0, %s33
      %s55 = sphi 0, %s57
      %s58 = sphi 0, %s55
      %s59 = sphi 0, %s58
      %s75 = sphi 0, %s59
      %s81 = sphi 0, %s83
      %s84 = sphi 0, %s81
      %s85 = sphi 0, %s84
      %s101 = sphi 0, %s85
      %s105 = sphi 0, %s105
      %s107 = sphi 0, %s105
      %s108 = sphi 0, %s107
      %s122 = sphi 0, %s108
      %s126 = sphi 0, %s126
      %s128 = sphi 0, %s126
      %s129 = sphi 0, %s128
      %s143 = sphi 0, %s129
    $region4: #{tpu_custom_call.1} parent=1 // loop_header_branch
      %22 = sbr.rel (%p20) target = $region8
    $region5: #{tpu_custom_call.1} parent=1 // loop_body
      %s24 = ssub.s32 %s19, 1
      %s25 = ssub.s32 %s19, 2
      %s26 = sadd.s32 %s19, 1
      %s27 = ssub.s32 %s19, %s26
      %p28 = scmp.eq.s32.totalorder %s27, 0
      %s30 = sadd.s32 %s29, 1
      %s31 = scalar_select %p28, %s29, %s30
      %p34 = pneg %p28
      %p35 = scmp.eq.s32.totalorder %s19, 1
      %p36 = por %p34, %p35
      %p37 = scmp.ne.s32.totalorder %s29, %s32
      %p38 = scmp.eq.s32.totalorder %s19, 0
      %p39 = por %p37, %p38
      %p40 = scmp.ne.s32.totalorder %s29, %s32
      %p41 = scmp.eq.s32.totalorder %s24, 1
      %p42 = por %p40, %p41
      %p43 = scmp.ne.s32.totalorder %s32, %s33
      %p44 = scmp.eq.s32.totalorder %s24, 0
      %p45 = por %p43, %p44
      %p46 = scmp.ne.s32.totalorder %s32, %s33
      %p47 = scmp.eq.s32.totalorder %s25, 1
      %p48 = por %p46, %p47
      %p50 = scmp.ne.s32.totalorder %s33, %s49
      %p51 = scmp.eq.s32.totalorder %s25, 0
      %p52 = por %p50, %p51
      %s53 = ssub.s32 %s19, %s26
      %p54 = scmp.eq.s32.totalorder %s53, 0
      %s56 = sadd.s32 %s55, 1
      %s57 = scalar_select %p54, %s55, %s56
      %p60 = pneg %p54
      %p61 = scmp.eq.s32.totalorder %s19, 1
      %p62 = por %p60, %p61
      %p63 = scmp.ne.s32.totalorder %s55, %s58
      %p64 = scmp.eq.s32.totalorder %s19, 0
      %p65 = por %p63, %p64
      %p66 = scmp.ne.s32.totalorder %s55, %s58
      %p67 = scmp.eq.s32.totalorder %s24, 1
      %p68 = por %p66, %p67
      %p69 = scmp.ne.s32.totalorder %s58, %s59
      %p70 = scmp.eq.s32.totalorder %s24, 0
      %p71 = por %p69, %p70
      %p72 = scmp.ne.s32.totalorder %s58, %s59
      %p73 = scmp.eq.s32.totalorder %s25, 1
      %p74 = por %p72, %p73
      %p76 = scmp.ne.s32.totalorder %s59, %s75
      %p77 = scmp.eq.s32.totalorder %s25, 0
      %p78 = por %p76, %p77
      %s79 = ssub.s32 %s19, %s26
      %p80 = scmp.eq.s32.totalorder %s79, 0
      %s82 = sadd.s32 %s81, 1
      %s83 = scalar_select %p80, %s81, %s82
      %p86 = pneg %p80
      %p87 = scmp.eq.s32.totalorder %s19, 1
      %p88 = por %p86, %p87
      %p89 = scmp.ne.s32.totalorder %s81, %s84
      %p90 = scmp.eq.s32.totalorder %s19, 0
      %p91 = por %p89, %p90
      %p92 = scmp.ne.s32.totalorder %s81, %s84
      %p93 = scmp.eq.s32.totalorder %s24, 1
      %p94 = por %p92, %p93
      %p95 = scmp.ne.s32.totalorder %s84, %s85
      %p96 = scmp.eq.s32.totalorder %s24, 0
      %p97 = por %p95, %p96
      %p98 = scmp.ne.s32.totalorder %s84, %s85
      %p99 = scmp.eq.s32.totalorder %s25, 1
      %p100 = por %p98, %p99
      %p102 = scmp.ne.s32.totalorder %s85, %s101
      %p103 = scmp.eq.s32.totalorder %s25, 0
      %p104 = por %p102, %p103
      %s106 = sadd.s32 %s105, 1
      %p109 = scmp.eq.s32.totalorder %s19, 1
      %p110 = scmp.ne.s32.totalorder %s105, %s107
      %p111 = scmp.eq.s32.totalorder %s19, 0
      %p112 = por %p110, %p111
      %p113 = scmp.ne.s32.totalorder %s105, %s107
      %p114 = scmp.eq.s32.totalorder %s24, 1
      %p115 = por %p113, %p114
      %p116 = scmp.ne.s32.totalorder %s107, %s108
      %p117 = scmp.eq.s32.totalorder %s24, 0
      %p118 = por %p116, %p117
      %p119 = scmp.ne.s32.totalorder %s107, %s108
      %p120 = scmp.eq.s32.totalorder %s25, 1
      %p121 = por %p119, %p120
      %p123 = scmp.ne.s32.totalorder %s108, %s122
      %p124 = scmp.eq.s32.totalorder %s25, 0
      %p125 = por %p123, %p124
      %s127 = sadd.s32 %s126, 1
      %p130 = scmp.eq.s32.totalorder %s19, 1
      %p131 = scmp.ne.s32.totalorder %s126, %s128
      %p132 = scmp.eq.s32.totalorder %s19, 0
      %p133 = por %p131, %p132
      %p134 = scmp.ne.s32.totalorder %s126, %s128
      %p135 = scmp.eq.s32.totalorder %s24, 1
      %p136 = por %p134, %p135
      %p137 = scmp.ne.s32.totalorder %s128, %s129
      %p138 = scmp.eq.s32.totalorder %s24, 0
      %p139 = por %p137, %p138
      %p140 = scmp.ne.s32.totalorder %s128, %s129
      %p141 = scmp.eq.s32.totalorder %s25, 1
      %p142 = por %p140, %p141
      %p144 = scmp.ne.s32.totalorder %s129, %s143
      %p145 = scmp.eq.s32.totalorder %s25, 0
      %p146 = por %p144, %p145
      %p147 = scmp.le.s32.totalorder 1, %s19
      %p148 = scmp.lt.s32.totalorder %s19, 3
      %p149 = pnand %p147, %p148
      %p150 = pneg %p149
      // Predicated region
      $region9: #{tpu_custom_call.1} parent=5 // pred_check
        _
      $region10: #{tpu_custom_call.1} parent=5 // pred_check_branch
        %152 = sbr.rel (%p149) target = $region12
      $region11: #{tpu_custom_call.1} parent=5 // pred_region
        %s153 = ssub.s32 %s19, 1
      $region12: #{tpu_custom_call.1} parent=5 // pred_fallthru
        _
      %p154 = scmp.lt.s32.totalorder %s19, 2
      // Predicated region
      $region13: #{tpu_custom_call.1} parent=5 // pred_check
        %p155 = pneg %p154
      $region14: #{tpu_custom_call.1} parent=5 // pred_check_branch
        %157 = sbr.rel (%p155) target = $region16
      $region15: #{tpu_custom_call.1} parent=5 // pred_region
        // Predicated region
        $region17: #{tpu_custom_call.1} parent=15 // pred_check
          %p158 = pneg %p39
        $region18: #{tpu_custom_call.1} parent=15 // pred_check_branch
          %160 = sbr.rel (%p158) target = $region20
        $region19: #{tpu_custom_call.1} parent=15 // pred_region
          %s161 = sand.u32 %s29, 1
          %s162 = scalar_lea.sflag [#allocation7], %s161
          %s163 = sand.u32 %s29, 1
          %s164 = smul.addr %s163, 4
          %s165 = scalar_lea.vmem [#allocation6], %s164
          %167 = vsyncadd %s162, 0
          %s168 = smul.addr %s19, 2
          %s169 = scalar_lea.hbm %s0, %s168
          %s170 = sshll.u32 %s169, 4
          %s171 = int_to_ptr.hbm [resolvable:$true] %s170
          %s172 = sshll.u32 %s165, 4
          %s173 = int_to_ptr.vmem [resolvable:$true] %s172
          %178 = dma.hbm_to_vmem [thread:$0]  %s171, 64, %s173, %s162, 64, 32, 2
        $region20: #{tpu_custom_call.1} parent=15 // pred_fallthru
          _
        // Predicated region
        $region21: #{tpu_custom_call.1} parent=15 // pred_check
          %p179 = pneg %p65
        $region22: #{tpu_custom_call.1} parent=15 // pred_check_branch
          %181 = sbr.rel (%p179) target = $region24
        $region23: #{tpu_custom_call.1} parent=15 // pred_region
          %s182 = sand.u32 %s19, 1
          %s183 = scalar_lea.sflag [#allocation10], %s182
          %s184 = sand.u32 %s55, 1
          %s185 = smul.addr %s184, 2
          %s186 = scalar_lea.vmem [#allocation9], %s185
          %188 = vsyncadd %s183, 0
          %s189 = smul.addr %s19, 2
          %s190 = scalar_lea.hbm %s1, %s189
          %s192 = sshll.u32 %s190, 4
          %s193 = int_to_ptr.hbm [resolvable:$true] %s192
          %s194 = sshll.u32 %s186, 4
          %s195 = int_to_ptr.vmem [resolvable:$true] %s194
          %197 = dma.hbm_to_vmem [thread:$0]  %s193, 32, %s195, %s183
        $region24: #{tpu_custom_call.1} parent=15 // pred_fallthru
          _
        // Predicated region
        $region25: #{tpu_custom_call.1} parent=15 // pred_check
          %p198 = pneg %p91
        $region26: #{tpu_custom_call.1} parent=15 // pred_check_branch
          %200 = sbr.rel (%p198) target = $region28
        $region27: #{tpu_custom_call.1} parent=15 // pred_region
          %s201 = sand.u32 %s19, 1
          %s202 = scalar_lea.sflag [#allocation10], %s201
          %s203 = sand.u32 %s81, 1
          %s204 = smul.addr %s203, 2
          %s205 = scalar_lea.vmem [#allocation11], %s204
          %207 = vsyncadd %s202, 0
          %s208 = smul.addr %s19, 2
          %s209 = scalar_lea.hbm %s2, %s208
          %s211 = sshll.u32 %s209, 4
          %s212 = int_to_ptr.hbm [resolvable:$true] %s211
          %s213 = sshll.u32 %s205, 4
          %s214 = int_to_ptr.vmem [resolvable:$true] %s213
          %216 = dma.hbm_to_vmem [thread:$0]  %s212, 32, %s214, %s202
        $region28: #{tpu_custom_call.1} parent=15 // pred_fallthru
          _
      $region16: #{tpu_custom_call.1} parent=5 // pred_fallthru
        _
      %p217 = scmp.le.s32.totalorder 1, %s19
      %p218 = scmp.lt.s32.totalorder %s19, 3
      %p219 = pnand %p217, %p218
      %p220 = pneg %p219
      // Predicated region
      $region29: #{tpu_custom_call.1} parent=5 // pred_check
        _
      $region30: #{tpu_custom_call.1} parent=5 // pred_check_branch
        %222 = sbr.rel (%p219) target = $region32
      $region31: #{tpu_custom_call.1} parent=5 // pred_region
        %s223 = ssub.s32 %s19, 1
        %s224 = sand.u32 %s32, 1
        %s225 = scalar_lea.sflag [#allocation7], %s224
        %s226 = sand.u32 %s32, 1
        %s227 = smul.addr %s226, 4
        %s228 = scalar_lea.vmem [#allocation6], %s227
        // Predicated region
        $region33: #{tpu_custom_call.1} parent=31 // pred_check
          %p229 = pneg %p45
        $region34: #{tpu_custom_call.1} parent=31 // pred_check_branch
          %231 = sbr.rel (%p229) target = $region36
        $region35: #{tpu_custom_call.1} parent=31 // pred_region
          %233 = dma.done %s225, 64
        $region36: #{tpu_custom_call.1} parent=31 // pred_fallthru
          _
        %s234 = sand.u32 %s24, 1
        %s235 = scalar_lea.sflag [#allocation10], %s234
        %s236 = sand.u32 %s58, 1
        %s237 = smul.addr %s236, 2
        %s238 = scalar_lea.vmem [#allocation9], %s237
        // Predicated region
        $region37: #{tpu_custom_call.1} parent=31 // pred_check
          %p239 = pneg %p71
        $region38: #{tpu_custom_call.1} parent=31 // pred_check_branch
          %241 = sbr.rel (%p239) target = $region40
        $region39: #{tpu_custom_call.1} parent=31 // pred_region
          %243 = dma.done %s235, 32
        $region40: #{tpu_custom_call.1} parent=31 // pred_fallthru
          _
        %s244 = sand.u32 %s24, 1
        %s245 = scalar_lea.sflag [#allocation10], %s244
        %s246 = sand.u32 %s84, 1
        %s247 = smul.addr %s246, 2
        %s248 = scalar_lea.vmem [#allocation11], %s247
        // Predicated region
        $region41: #{tpu_custom_call.1} parent=31 // pred_check
          %p249 = pneg %p97
        $region42: #{tpu_custom_call.1} parent=31 // pred_check_branch
          %251 = sbr.rel (%p249) target = $region44
        $region43: #{tpu_custom_call.1} parent=31 // pred_region
          %253 = dma.done %s245, 32
        $region44: #{tpu_custom_call.1} parent=31 // pred_fallthru
          _
        %s254 = sand.u32 %s32, 1
        %s255 = scalar_lea.sflag [#allocation7], %s254
        %s256 = sand.u32 %s32, 1
        %s257 = smul.addr %s256, 4
        %s258 = scalar_lea.vmem [#allocation6], %s257
        %p259 = pneg %p45
        %p260 = pneg %p42
        %s261 = sand.u32 %s24, 1
        %s262 = scalar_lea.sflag [#allocation10], %s261
        %s263 = sand.u32 %s58, 1
        %s264 = smul.addr %s263, 2
        %s265 = scalar_lea.vmem [#allocation9], %s264
        %p266 = pneg %p71
        %p267 = pneg %p68
        %s268 = sand.u32 %s24, 1
        %s269 = scalar_lea.sflag [#allocation10], %s268
        %s270 = sand.u32 %s84, 1
        %s271 = smul.addr %s270, 2
        %s272 = scalar_lea.vmem [#allocation11], %s271
        %p273 = pneg %p97
        %p274 = pneg %p94
        %p275 = pneg %p118
        %p276 = pneg %p115
        %p277 = pneg %p139
        %p278 = pneg %p136
        %p279 = scmp.eq.s32.totalorder %s24, 0
        // Predicated region
        $region45: #{tpu_custom_call.1} parent=31 // pred_check
          %p280 = pneg %p279
        $region46: #{tpu_custom_call.1} parent=31 // pred_check_branch
          %282 = sbr.rel (%p280) target = $region48
        $region47: #{tpu_custom_call.1} parent=31 // pred_region
          %283 = vst [vmem:[#allocation2] sm:$0x3] 0.0
          %284 = vst [vmem:[#allocation3] sm:$0x3] 0.0
          %285 = vst [vmem:[#allocation4] sm:$0x3] 0.0
          %286 = vst [vmem:[#allocation5] sm:$0x3] 0.0
        $region48: #{tpu_custom_call.1} parent=31 // pred_fallthru
          _
        %v287 = vld [vmem:[%s228] sm:$0x1]
        %v288 = vld [vmem:[%s228 + $0x1] sm:$0x1]
        %vm289 = vcmp.le.f32.partialorder %v287, %v288
        %v290 = vsel %vm289, 1, 0
        %v291 = vcvt.s32.f32 %v290
        %s292 = scalar_lea.vmem %s228, 2 [#allocation6]
        %v293 = vld [vmem:[%s292] sm:$0x1]
        %v294 = vld [vmem:[%s292 + $0x1] sm:$0x1]
        %vm295 = vcmp.le.f32.partialorder %v293, %v294
        %v296 = vsel %vm295, 1, 0
        %v297 = vcvt.s32.f32 %v296
        %v298 = vadd.f32 %v291, %v297
        %v299 = vld [vmem:[%s248] sm:$0x3]
        %v300 = vld [vmem:[%s238] sm:$0x3]
        %vm301 = vcmp.eq.s32.totalorder %v300, 0
        %v302 = vsel %vm301, 1, 0
        %v303 = vcvt.s32.f32 %v302
        %v304 = vmul.f32 %v299, %v299
        %v305 = vperm.slane %v298, 0
        %v306 = vmul.f32 %v305, %v304
        %v307 = vld [vmem:[#allocation2] sm:$0x3]
        %v308 = vmul.f32 %v306, %v303
        %v309 = vadd.f32 %v307, %v308
        %310 = vst [vmem:[#allocation2] sm:$0x3] %v309
        %v311 = vld [vmem:[#allocation3] sm:$0x3]
        %v312 = vmul.f32 %v303, %v299
        %v313 = vadd.f32 %v311, %v312
        %314 = vst [vmem:[#allocation3] sm:$0x3] %v313
        %v315 = vld [vmem:[#allocation4] sm:$0x3]
        %v316 = vadd.f32 %v315, %v306
        %317 = vst [vmem:[#allocation4] sm:$0x3] %v316
        %v318 = vld [vmem:[#allocation5] sm:$0x3]
        %v319 = vadd.f32 %v318, %v299
        %320 = vst [vmem:[#allocation5] sm:$0x3] %v319
        %p321 = scmp.eq.s32.totalorder %s24, 1
        // Predicated region
        $region49: #{tpu_custom_call.1} parent=31 // pred_check
          %p322 = pneg %p321
        $region50: #{tpu_custom_call.1} parent=31 // pred_check_branch
          %324 = sbr.rel (%p322) target = $region52
        $region51: #{tpu_custom_call.1} parent=31 // pred_region
          %v325 = vld [vmem:[#allocation2] sm:$0x3]
          %vm326 = vcmask 1041408
          %v327 = vsel %vm326, %v325, 0.0
          %328 = vadd.xlane.f32.xlu0 %v327
          %v329 = vpop.xlane.xlu0 %328
          %v330 = vld [vmem:[#allocation3] sm:$0x3]
          %v331 = vsel %vm326, %v330, 0.0
          %332 = vadd.xlane.f32.xlu0 %v331
          %v333 = vpop.xlane.xlu0 %332
          %v334 = vld [vmem:[#allocation4] sm:$0x3]
          %v335 = vsel %vm326, %v334, 0.0
          %336 = vadd.xlane.f32.xlu0 %v335
          %v337 = vpop.xlane.xlu0 %336
          %v338 = vsub.f32 %v337, %v329
          %v339 = vld [vmem:[#allocation5] sm:$0x3]
          %v340 = vsel %vm326, %v339, 0.0
          %341 = vadd.xlane.f32.xlu0 %v340
          %v342 = vpop.xlane.xlu0 %341
          %v343 = vsub.f32 %v342, %v333
          %v344 = vrcp.pop %v333
          %v345 = vmul.f32 %v333, %v344
          %v346 = vsub.f32 1.0, %v345
          %v347 = vmul.f32 %v344, %v346
          %v348 = vadd.f32 %v344, %v347
          %vm349 = vweird.f32 %v333
          %vm350 = vweird.f32 %v344
          %vm351 = vmor %vm349, %vm350
          %v352 = vsel %vm351, %v344, %v348
          %v353 = vand.u32 2147483647, %v333
          %vm354 = vcmp.eq.f32.partialorder %v353, 8.507059e+37
          %v355 = vand.u32 %v333, 2147483648
          %v356 = vor.u32 1.1754944e-38, %v355
          %v357 = vsel %vm354, %v356, %v352
          %v358 = vmul.f32 %v329, %v357
          %v359 = vsel %vm326, %v358, 0.0
          %v360 = vrot.slane %v359, 4
          %v361 = vadd.f32 %v359, %v360
          %v362 = vrot.slane %v361, 2
          %v363 = vadd.f32 %v361, %v362
          %v364 = vrot.slane %v363, 1
          %v365 = vadd.f32 %v363, %v364
          %v366 = vmul.f32 %v365, 0.5
          %vm367 = vcmask 0
          %368 = vst.msk [vmem:[#allocation12] sm:$0x1] %vm367, %v366
          %v369 = vrcp.pop %v343
          %v370 = vmul.f32 %v343, %v369
          %v371 = vsub.f32 1.0, %v370
          %v372 = vmul.f32 %v369, %v371
          %v373 = vadd.f32 %v369, %v372
          %vm374 = vweird.f32 %v343
          %vm375 = vweird.f32 %v369
          %vm376 = vmor %vm374, %vm375
          %v377 = vsel %vm376, %v369, %v373
          %v378 = vand.u32 2147483647, %v343
          %vm379 = vcmp.eq.f32.partialorder %v378, 8.507059e+37
          %v380 = vand.u32 %v343, 2147483648
          %v381 = vor.u32 1.1754944e-38, %v380
          %v382 = vsel %vm379, %v381, %v377
          %v383 = vmul.f32 %v338, %v382
          %v384 = vsel %vm326, %v383, 0.0
          %v385 = vrot.slane %v384, 4
          %v386 = vadd.f32 %v384, %v385
          %v387 = vrot.slane %v386, 2
          %v388 = vadd.f32 %v386, %v387
          %v389 = vrot.slane %v388, 1
          %v390 = vadd.f32 %v388, %v389
          %v391 = vmul.f32 %v390, 0.5
          %392 = vst.msk [vmem:[#allocation13] sm:$0x1] %vm367, %v391
        $region52: #{tpu_custom_call.1} parent=31 // pred_fallthru
          _
        // Predicated region
        $region53: #{tpu_custom_call.1} parent=31 // pred_check
          %p393 = pneg %p115
        $region54: #{tpu_custom_call.1} parent=31 // pred_check_branch
          %395 = sbr.rel (%p393) target = $region56
        $region55: #{tpu_custom_call.1} parent=31 // pred_region
          %397 = vsyncadd [#allocation8], 0
          %s399 = sshll.u32 [#allocation12], 4
          %s400 = int_to_ptr.vmem [resolvable:$true] %s399
          %s401 = sshll.u32 %s3, 4
          %s402 = int_to_ptr.hbm [resolvable:$true] %s401
          %404 = dma.vmem_to_hbm [thread:$0]  %s400, 16, %s402, [#allocation8]
        $region56: #{tpu_custom_call.1} parent=31 // pred_fallthru
          _
        // Predicated region
        $region57: #{tpu_custom_call.1} parent=31 // pred_check
          %p405 = pneg %p136
        $region58: #{tpu_custom_call.1} parent=31 // pred_check_branch
          %407 = sbr.rel (%p405) target = $region60
        $region59: #{tpu_custom_call.1} parent=31 // pred_region
          %409 = vsyncadd [#allocation14], 0
          %s411 = sshll.u32 [#allocation13], 4
          %s412 = int_to_ptr.vmem [resolvable:$true] %s411
          %s413 = sshll.u32 %s4, 4
          %s414 = int_to_ptr.hbm [resolvable:$true] %s413
          %416 = dma.vmem_to_hbm [thread:$0]  %s412, 16, %s414, [#allocation14]
        $region60: #{tpu_custom_call.1} parent=31 // pred_fallthru
          _
        // Predicated region
        $region61: #{tpu_custom_call.1} parent=31 // pred_check
          %p417 = pneg %p115
        $region62: #{tpu_custom_call.1} parent=31 // pred_check_branch
          %419 = sbr.rel (%p417) target = $region64
        $region63: #{tpu_custom_call.1} parent=31 // pred_region
          %421 = dma.done [#allocation8], 16
        $region64: #{tpu_custom_call.1} parent=31 // pred_fallthru
          _
        // Predicated region
        $region65: #{tpu_custom_call.1} parent=31 // pred_check
          %p422 = pneg %p136
        $region66: #{tpu_custom_call.1} parent=31 // pred_check_branch
          %424 = sbr.rel (%p422) target = $region68
        $region67: #{tpu_custom_call.1} parent=31 // pred_region
          %426 = dma.done [#allocation14], 16
        $region68: #{tpu_custom_call.1} parent=31 // pred_fallthru
          _
      $region32: #{tpu_custom_call.1} parent=5 // pred_fallthru
        _
      %p427 = scmp.le.s32.totalorder 2, %s19
      // Predicated region
      $region69: #{tpu_custom_call.1} parent=5 // pred_check
        %p428 = pneg %p427
      $region70: #{tpu_custom_call.1} parent=5 // pred_check_branch
        %430 = sbr.rel (%p428) target = $region72
      $region71: #{tpu_custom_call.1} parent=5 // pred_region
        %s431 = ssub.s32 %s19, 2
      $region72: #{tpu_custom_call.1} parent=5 // pred_fallthru
        _
    $region6: #{tpu_custom_call.1} parent=1 // loop_footer
      %s23 = sadd.s32 1, %s19
    $region7: #{tpu_custom_call.1} parent=1 // loop_footer_branch
      %18 = sbr.rel target = $region3
    $region8: #{tpu_custom_call.1} parent=1 // loop_exit
      _
    %432 = vsyncpa [#allocation7], 1
    %s433 = scalar_lea.sflag [#allocation7], 1
    %434 = vsyncpa %s433, 1
    %435 = vsyncpa [#allocation10], 1
    %s436 = scalar_lea.sflag [#allocation10], 1
    %437 = vsyncpa %s436, 1
    %438 = vsyncpa [#allocation8], 1
    %s439 = scalar_lea.sflag [#allocation8], 1
    %440 = vsyncpa %s439, 1
    %441 = vsyncpa [#allocation14], 1

</llo_original>
